<compile_context>
chip_gen: v7x
topology: tpu7x:2x2x1
jax: 0.10.0
libtpu: 0.0.40
codegen_flags: <defaults>
</compile_context>

<pallas_src>
import math

import jax
import jax.numpy as jnp
from jax import lax
from jax.experimental import pallas as pl
from jax.experimental.pallas import tpu as pltpu


def _round_up(v, m):
    return ((v + m - 1) // m) * m


def masked_linear_kernel(x_ref, w_ref, b_ref, o_ref):
    """Computes one (tm, tn) f32 output tile; K is the innermost grid axis.

    The output block index (i, j) does not depend on k, so the tile stays
    resident in VMEM across the whole K reduction: initialize it with the bias
    at k == 0, accumulate one MXU matmul per K step, and let the pipeline
    write it back to HBM after the last step.
    """
    k = pl.program_id(2)

    @pl.when(k == 0)
    def _init():
        # Bias added exactly once per output tile.
        o_ref[...] = jnp.broadcast_to(b_ref[...], o_ref.shape)

    # x_ref: (tm, tk) bf16, w_ref: (tn, tk) bf16.  Contract dim 1 of both
    # operands so the weight tile is consumed as stored (no transpose).
    o_ref[...] += lax.dot_general(
        x_ref[...], w_ref[...],
        dimension_numbers=(((1,), (1,)), ((), ())),
        preferred_element_type=jnp.float32,
    )


def customized_linear(x, weight, mask, bias, *, tm=128, tn=256, tk=512):
    """Forward of CustomizedLinear: x @ (weight * mask).T + bias.

    x:      (B, in_features) float32
    weight: (out_features, in_features) float32
    mask:   (out_features, in_features) 0/1 float32 (already transposed, as in torch)
    bias:   (out_features,) float32
    returns (B, out_features) float32
    """
    B, K = x.shape
    N, K2 = weight.shape
    assert K == K2 and mask.shape == weight.shape and bias.shape == (N,)

    # The connectivity mask is static: fold it into the weights once in the
    # wrapper instead of streaming a second f32 array from HBM every tile.
    w_masked = weight * mask

    # Clamp tile sizes to the (padded) problem size; keep sublane/lane alignment.
    tm = max(8,   min(tm, _round_up(B, 8)))
    tn = max(128, min(tn, _round_up(N, 128)))
    tk = max(128, min(tk, _round_up(K, 128)))
    Bp, Np, Kp = _round_up(B, tm), _round_up(N, tn), _round_up(K, tk)

    # bf16 operands for the MXU (f32 accumulation in the resident output tile);
    # zero padding contributes exact zeros and is sliced off at the end.
    x_p = jnp.zeros((Bp, Kp), jnp.bfloat16).at[:B, :K].set(x.astype(jnp.bfloat16))
    w_p = jnp.zeros((Np, Kp), jnp.bfloat16).at[:N, :K].set(
        w_masked.astype(jnp.bfloat16))
    b_p = jnp.zeros((1, Np), jnp.float32).at[0, :N].set(bias.astype(jnp.float32))

    grid = (Bp // tm, Np // tn, Kp // tk)

    cost = pl.CostEstimate(
        flops=2 * Bp * Kp * Np,
        transcendentals=0,
        bytes_accessed=(x_p.size * 2 + w_p.size * 2 + b_p.size * 4 + Bp * Np * 4),
    )

    out_p = pl.pallas_call(
        masked_linear_kernel,
        out_shape=jax.ShapeDtypeStruct((Bp, Np), jnp.float32),
        grid_spec=pltpu.PrefetchScalarGridSpec(
            num_scalar_prefetch=0,
            grid=grid,
            in_specs=[
                pl.BlockSpec((tm, tk), lambda i, j, k: (i, k)),   # x tile
                pl.BlockSpec((tn, tk), lambda i, j, k: (j, k)),   # masked weight
                pl.BlockSpec((1, tn), lambda i, j, k: (0, j)),    # bias row (resident)
            ],
            out_specs=pl.BlockSpec((tm, tn), lambda i, j, k: (i, j)),
        ),
        compiler_params=pltpu.CompilerParams(
            dimension_semantics=("parallel", "parallel", "arbitrary"),
        ),
        cost_estimate=cost,
    )(x_p, w_p, b_p)

    return out_p[:B, :N]


if __name__ == "__main__":
    # Small shapes consistent with the module's forward (2-D input).
    batch = 8
    in_features = 32
    out_features = 16

    key = jax.random.PRNGKey(0)
    k_x, k_w, k_b, k_m = jax.random.split(key, 4)

    # Deterministic parameter init mirroring init_params():
    #   uniform(-stdv, stdv) with stdv = 1/sqrt(in_features)
    stdv = 1.0 / math.sqrt(in_features)
    weight = jax.random.uniform(k_w, (out_features, in_features),
                                jnp.float32, -stdv, stdv)
    bias = jax.random.uniform(k_b, (out_features,), jnp.float32, -stdv, stdv)

    # Mask supplied as (in_features, out_features) 0/1 array, then transposed
    # exactly as the PyTorch module does.
    mask_io = (jax.random.uniform(k_m, (in_features, out_features))
               > 0.5).astype(jnp.float32)
    mask = mask_io.T                                          # (out, in)

    x = jax.random.normal(k_x, (batch, in_features), jnp.float32)

    fwd = jax.jit(customized_linear)
    out = jax.block_until_ready(fwd(x, weight, mask, bias))
    assert out.shape == (batch, out_features)

    # Reference checks.  Kernel feeds the MXU bf16 operands with f32
    # accumulation, so compare tightly against a bf16-cast reference and
    # loosely against the pure f32 reference.
    wm = weight * mask
    ref_f32 = x @ wm.T + bias[None, :]
    ref_bf16 = (x.astype(jnp.bfloat16).astype(jnp.float32)
                @ wm.astype(jnp.bfloat16).astype(jnp.float32).T) + bias[None, :]
    assert jnp.allclose(out, ref_bf16, atol=1e-3, rtol=1e-3)
    assert jnp.allclose(out, ref_f32, atol=3e-2, rtol=3e-2)

    print("KERNEL_OK")
</pallas_src>

<mosaic_0001>
module attributes {stable_mosaic.version = 11 : i64} {
  func.func @masked_linear_kernel(%arg0: i32, %arg1: i32, %arg2: i32, %arg3: memref<8x128xbf16, #tpu.memory_space<vmem>>, %arg4: memref<128x128xbf16, #tpu.memory_space<vmem>>, %arg5: memref<1x128xf32, #tpu.memory_space<vmem>>, %arg6: memref<8x128xf32, #tpu.memory_space<vmem>>) attributes {dimension_semantics = [#tpu.dimension_semantics<parallel>, #tpu.dimension_semantics<parallel>, #tpu.dimension_semantics<arbitrary>], iteration_bounds = array<i64: 1, 1, 1>, scalar_prefetch = 0 : i64, scratch_operands = 0 : i64, tpu.core_type = #tpu.core_type<tc>, window_params = [{transform_indices = @transform_0, window_bounds = array<i64: 8, 128>}, {transform_indices = @transform_1, window_bounds = array<i64: 128, 128>}, {transform_indices = @transform_2, window_bounds = array<i64: 1, 128>}, {transform_indices = @transform_3, window_bounds = array<i64: 8, 128>}]} {
    %c0_i32 = arith.constant 0 : i32
    %0 = arith.cmpi eq, %arg2, %c0_i32 : i32
    %1 = arith.extui %0 : i1 to i32
    %c0_i32_0 = arith.constant 0 : i32
    %2 = arith.cmpi ne, %1, %c0_i32_0 : i32
    scf.if %2 {
      %c0_8 = arith.constant 0 : index
      %c0_9 = arith.constant 0 : index
      %9 = vector.load %arg5[%c0_8, %c0_9] : memref<1x128xf32, #tpu.memory_space<vmem>>, vector<1x128xf32>
      %10 = vector.shape_cast %9 : vector<1x128xf32> to vector<1x128xf32>
      %11 = vector.broadcast %10 : vector<1x128xf32> to vector<8x128xf32>
      %c0_10 = arith.constant 0 : index
      %c0_11 = arith.constant 0 : index
      %12 = vector.load %arg6[%c0_10, %c0_11] : memref<8x128xf32, #tpu.memory_space<vmem>>, vector<8x128xf32>
      tpu.vector_store %arg6[%c0_10, %c0_11], %11 {strides = array<i32>} : memref<8x128xf32, #tpu.memory_space<vmem>>, vector<8x128xf32>,
    } else {
    }
    %c0 = arith.constant 0 : index
    %c0_1 = arith.constant 0 : index
    %3 = vector.load %arg6[%c0, %c0_1] : memref<8x128xf32, #tpu.memory_space<vmem>>, vector<8x128xf32>
    %c0_2 = arith.constant 0 : index
    %c0_3 = arith.constant 0 : index
    %4 = vector.load %arg3[%c0_2, %c0_3] : memref<8x128xbf16, #tpu.memory_space<vmem>>, vector<8x128xbf16>
    %c0_4 = arith.constant 0 : index
    %c0_5 = arith.constant 0 : index
    %5 = vector.load %arg4[%c0_4, %c0_5] : memref<128x128xbf16, #tpu.memory_space<vmem>>, vector<128x128xbf16>
    %cst = arith.constant dense<0.000000e+00> : vector<8x128xf32>
    %6 = tpu.matmul %4, %5, %cst {dimension_numbers = #tpu.dot_dimension_numbers<[1], [1], [0], [0], [0, 0, 1, 0], [], []>} : vector<8x128xbf16>, vector<128x128xbf16>, vector<8x128xf32> -> vector<8x128xf32>
    %7 = arith.addf %3, %6 : vector<8x128xf32>
    %c0_6 = arith.constant 0 : index
    %c0_7 = arith.constant 0 : index
    %8 = vector.load %arg6[%c0_6, %c0_7] : memref<8x128xf32, #tpu.memory_space<vmem>>, vector<8x128xf32>
    tpu.vector_store %arg6[%c0_6, %c0_7], %7 {strides = array<i32>} : memref<8x128xf32, #tpu.memory_space<vmem>>, vector<8x128xf32>,
    return
  }
  func.func @transform_0(%arg0: i32, %arg1: i32, %arg2: i32) -> (i32, i32) {
    %c0_i32 = arith.constant 0 : i32
    return %arg0, %arg2 : i32, i32
  }
  func.func @transform_1(%arg0: i32, %arg1: i32, %arg2: i32) -> (i32, i32) {
    %c0_i32 = arith.constant 0 : i32
    return %arg1, %arg2 : i32, i32
  }
  func.func @transform_2(%arg0: i32, %arg1: i32, %arg2: i32) -> (i32, i32) {
    %c0_i32 = arith.constant 0 : i32
    %c0_i32_0 = arith.constant 0 : i32
    return %c0_i32, %arg1 : i32, i32
  }
  func.func @transform_3(%arg0: i32, %arg1: i32, %arg2: i32) -> (i32, i32) {
    %c0_i32 = arith.constant 0 : i32
    return %arg0, %arg1 : i32, i32
  }
}

</mosaic_0001>

<llo_original>
// kernel: customized_linear.1
$region0: #{customized_linear.1}
  #allocation0 [shape = 'u32[]', space=smem, size = 0x4, offset = 0x4, fixed_abs, tag = 'smem constant byte address 0x4 - core index']
  #allocation1 [shape = 'u32[144,128]{1,0:T(1,128)}', space=vmem, size = 0x12000, scoped, tag = 'internal scratch']
  %s0 = inlined_call_operand.vmem [shape: bf16[8,128], index: 0, kind: input, shape index: {}]
  %s1 = inlined_call_operand.vmem [shape: bf16[128,128], index: 1, kind: input, shape index: {}]
  %s2 = inlined_call_operand.vmem [shape: f32[1,128], index: 2, kind: input, shape index: {}]
  %s3 = inlined_call_operand.hbm [shape: f32[8,128], index: 3, kind: output, shape index: {}]
  %s4 = sld [smem:[#allocation0]]
  $region26: #{customized_linear.1} parent=0
    _
  %s6 = ssub.s32 1, %s4
  %s7 = scalar_select 0, %s6, %s4
  $region1: #{customized_linear.1} parent=0
    #allocation2 [shape = 'u8[4096]{0}', space=vmem, size = 0x1000, scoped, tag = 'output window, operand 0, single buffered']
    #allocation3 [shape = 's32[1]{0}', space=sflag, size = 0x4, scoped, tag = 'scoped memory for customized_linear.1']
    %8 = vsyncpa [#allocation3], 0
    // Predicated region
    $region2: #{customized_linear.1} parent=1 // pred_check
      _
    $region3: #{customized_linear.1} parent=1 // pred_check_branch
      %10 = sbr.rel (0) target = $region5
    $region4: #{customized_linear.1} parent=1 // pred_region
      _
    $region5: #{customized_linear.1} parent=1 // pred_fallthru
      _
    // Predicated region
    $region6: #{customized_linear.1} parent=1 // pred_check
      _
    $region7: #{customized_linear.1} parent=1 // pred_check_branch
      %12 = sbr.rel (0) target = $region9
    $region8: #{customized_linear.1} parent=1 // pred_region
      _
    $region9: #{customized_linear.1} parent=1 // pred_fallthru
      _
    // Predicated region
    $region10: #{customized_linear.1} parent=1 // pred_check
      _
    $region11: #{customized_linear.1} parent=1 // pred_check_branch
      %14 = sbr.rel (0) target = $region13
    $region12: #{customized_linear.1} parent=1 // pred_region
      _
    $region13: #{customized_linear.1} parent=1 // pred_fallthru
      _
    %p16 = scmp.eq.s32.totalorder 0, 0
    // Predicated region
    $region14: #{customized_linear.1} parent=1 // pred_check
      %p17 = pneg %p16
    $region15: #{customized_linear.1} parent=1 // pred_check_branch
      %19 = sbr.rel (%p17) target = $region17
    $region16: #{customized_linear.1} parent=1 // pred_region
      %v20 = vld [vmem:[%s2] sm:$0x1]
      %v22 = vlaneseq
      %v23 = vshrl.u32 %v22, 7
      %v24 = vsub.s32 0, %v23
      %v25 = vrot.slane %v20, %v24
      %27 = vst [vmem:[#allocation2] sm:$0xff] %v25
    $region17: #{customized_linear.1} parent=1 // pred_fallthru
      _
    %v28 = vld [vmem:[#allocation2] sm:$0xff]
    %v29 = vld [vmem:[%s0] sm:$0xf]
    %v30 = vld [vmem:[%s1] sm:$0xf]
    %v31 = vld [vmem:[%s1 + $0x4] sm:$0xf]
    %v32 = vld [vmem:[%s1 + $0x8] sm:$0xf]
    %v33 = vld [vmem:[%s1 + $0xc] sm:$0xf]
    %v34 = vld [vmem:[%s1 + $0x10] sm:$0xf]
    %v35 = vld [vmem:[%s1 + $0x14] sm:$0xf]
    %v36 = vld [vmem:[%s1 + $0x18] sm:$0xf]
    %v37 = vld [vmem:[%s1 + $0x1c] sm:$0xf]
    %v38 = vld [vmem:[%s1 + $0x20] sm:$0xf]
    %v39 = vld [vmem:[%s1 + $0x24] sm:$0xf]
    %v40 = vld [vmem:[%s1 + $0x28] sm:$0xf]
    %v41 = vld [vmem:[%s1 + $0x2c] sm:$0xf]
    %v42 = vld [vmem:[%s1 + $0x30] sm:$0xf]
    %v43 = vld [vmem:[%s1 + $0x34] sm:$0xf]
    %v44 = vld [vmem:[%s1 + $0x38] sm:$0xf]
    %v45 = vld [vmem:[%s1 + $0x3c] sm:$0xf]
    %v62 = vunpack.c.l.b16 %v30
    %v63 = vunpack.c.l.b16 %v31
    %v64 = vunpack.c.l.b16 %v32
    %v65 = vunpack.c.l.b16 %v33
    %v66 = vunpack.c.l.b16 %v34
    %v67 = vunpack.c.l.b16 %v35
    %v68 = vunpack.c.l.b16 %v36
    %v69 = vunpack.c.l.b16 %v37
    %v70 = vunpack.c.l.b16 %v38
    %v71 = vunpack.c.l.b16 %v39
    %v72 = vunpack.c.l.b16 %v40
    %v73 = vunpack.c.l.b16 %v41
    %v74 = vunpack.c.l.b16 %v42
    %v75 = vunpack.c.l.b16 %v43
    %v76 = vunpack.c.l.b16 %v44
    %v77 = vunpack.c.l.b16 %v45
    %v78 = vpack.c.b16 %v63, %v62
    %v79 = vpack.c.b16 %v65, %v64
    %v80 = vpack.c.b16 %v67, %v66
    %v81 = vpack.c.b16 %v69, %v68
    %v82 = vpack.c.b16 %v71, %v70
    %v83 = vpack.c.b16 %v73, %v72
    %v84 = vpack.c.b16 %v75, %v74
    %v85 = vpack.c.b16 %v77, %v76
    %94 = vmatprep.subr.bf16.mxu0 0
    %95 = vmatpush1.bf16.xpose.msra.mxu0 %v78
    %96 = vmatprep.subr.bf16.mxu0 0
    %97 = vmatpush1.bf16.xpose.msra.mxu0 %v79
    %98 = vmatprep.subr.bf16.mxu0 0
    %99 = vmatpush1.bf16.xpose.msra.mxu0 %v80
    %100 = vmatprep.subr.bf16.mxu0 0
    %101 = vmatpush1.bf16.xpose.msra.mxu0 %v81
    %102 = vmatprep.subr.bf16.mxu0 0
    %103 = vmatpush1.bf16.xpose.msra.mxu0 %v82
    %104 = vmatprep.subr.bf16.mxu0 0
    %105 = vmatpush1.bf16.xpose.msra.mxu0 %v83
    %106 = vmatprep.subr.bf16.mxu0 0
    %107 = vmatpush1.bf16.xpose.msra.mxu0 %v84
    %108 = vmatprep.subr.bf16.mxu0 0
    %109 = vmatpush1.bf16.xpose.msra.mxu0 %v85
    %110 = vmatprep.subr.bf16.mxu0 0
    %111 = vmatpush1.bf16.xpose.msra.mxu0 0
    %112 = vmatprep.subr.bf16.mxu0 0
    %113 = vmatpush1.bf16.xpose.msra.mxu0 0
    %114 = vmatprep.subr.bf16.mxu0 0
    %115 = vmatpush1.bf16.xpose.msra.mxu0 0
    %116 = vmatprep.subr.bf16.mxu0 0
    %117 = vmatpush1.bf16.xpose.msra.mxu0 0
    %118 = vmatprep.subr.bf16.mxu0 0
    %119 = vmatpush1.bf16.xpose.msra.mxu0 0
    %120 = vmatprep.subr.bf16.mxu0 0
    %121 = vmatpush1.bf16.xpose.msra.mxu0 0
    %122 = vmatprep.subr.bf16.mxu0 0
    %123 = vmatpush1.bf16.xpose.msra.mxu0 0
    %124 = vmatprep.subr.bf16.mxu0 0
    %125 = vmatpush1.bf16.xpose.msra.mxu0 0
    %126 = vmatprep.mubr.bf16.mxu0 0
    %127 = vmatmul.mubr.bf16.gmra.mrb[0].mxu0 %v29
    %v128 = vpop.f32.mrb[0].mxu0
    %v129 = vadd.f32 0.0, %v128
    %v130 = vpop.f32.mrb[0].mxu0
    %v131 = vpop.f32.mrb[0].mxu0
    %v132 = vpop.f32.mrb[0].mxu0
    %133 = vdwg.mxu0
    %v134 = vadd.f32 %v28, %v129
    %135 = vst [vmem:[#allocation2] sm:$0xff] %v134
    // Predicated region
    $region18: #{customized_linear.1} parent=1 // pred_check
      _
    $region19: #{customized_linear.1} parent=1 // pred_check_branch
      %137 = sbr.rel (0) target = $region21
    $region20: #{customized_linear.1} parent=1 // pred_region
      %s139 = ssub.s32 128, 128
      %140 = vsyncadd [#allocation3], %s139
      %s142 = sshll.u32 [#allocation2], 4
      %s143 = int_to_ptr.vmem [resolvable:$true] %s142
      %145 = dma.vmem_to_hbm [thread:$0]  %s143, 128, %s3, [#allocation3]
    $region21: #{customized_linear.1} parent=1 // pred_fallthru
      _
    // Predicated region
    $region22: #{customized_linear.1} parent=1 // pred_check
      _
    $region23: #{customized_linear.1} parent=1 // pred_check_branch
      %147 = sbr.rel (0) target = $region25
    $region24: #{customized_linear.1} parent=1 // pred_region
      %148 = dma.done [#allocation3], 128
    $region25: #{customized_linear.1} parent=1 // pred_fallthru
      _
    %149 = vsyncpa [#allocation3], 1

</llo_original>
